<compile_context>
chip_gen: v6e
topology: v6e:2x2x1
jax: 0.10.0
libtpu: 0.0.40
codegen_flags: <defaults>
</compile_context>

<pallas_src>
import functools

import jax
import jax.numpy as jnp
from jax.experimental import pallas as pl
from jax.experimental.pallas import tpu as pltpu


def _optA_shortcut_kernel(x_ref, o_ref, *, c_in, pad, ho, wo, w):
    """Option-A shortcut for one multi-batch block.

    x_ref : (bn, C_in*Ho, 2*W)  -- each row is [even H row | odd H row] of W
    o_ref : (bn, C_out*Ho, Wo)  -- flattened NCHW output rows
    """
    bn = x_ref.shape[0]
    out_dtype = o_ref.dtype
    big_r = bn * c_in * ho

    # 1) even H rows: contiguous lane slice of the loaded block.
    xb = x_ref[...]                                   # (bn, C_in*Ho, 2W)
    rows = xb[:, :, :w].reshape(big_r, w)             # (bn*C_in*Ho, W)

    # 2) even W columns: put W on the sublane axis, split it into (Wo, 2) and
    #    keep parity 0.  Only 2-D transposes, leading-dim reshapes and a
    #    static index -- no strided slices, no gathers, no scratch.
    t = rows.T                                        # (W, bn*C_in*Ho)
    ev = t.reshape(wo, 2, big_r)[:, 0, :]             # (Wo, bn*C_in*Ho)
    sub = ev.T                                        # (bn*C_in*Ho, Wo)
    sub = sub.reshape(bn, c_in * ho, wo)              # (bn, C_in*Ho, Wo)

    # 3) write: zero pad-channel bands (one hoisted constant, two whole-block
    #    stores) and the valid channel band.
    if pad > 0:
        zeros = jnp.zeros((bn, pad * ho, wo), out_dtype)
        o_ref[:, 0:pad * ho, :] = zeros
        o_ref[:, (pad + c_in) * ho:(c_in + 2 * pad) * ho, :] = zeros
    o_ref[:, pad * ho:(pad + c_in) * ho, :] = sub.astype(out_dtype)


def lambda_layer(x, planes):
    """Pallas implementation of the option-A shortcut lambda (NCHW)."""
    n, c_in, h, w = x.shape
    if (h % 2) or (w % 2):
        # TODO(synk): PyTorch x[:, :, ::2, ::2] keeps ceil(H/2) rows for odd H;
        # the ResNet option-A use always has even spatial dims.
        raise ValueError("option-A shortcut kernel requires even H and W")
    pad = planes // 4
    c_out = c_in + 2 * pad
    ho, wo = h // 2, w // 2
    itemsize = jnp.dtype(x.dtype).itemsize

    # --- choose the batch block size from a VMEM budget -----------------
    # double-buffered input block + output block per sample (bytes)
    per_sample = 2 * (c_in * ho * 2 * w + c_out * ho * wo) * itemsize
    budget = 16 * 1024 * 1024          # leaves headroom for in-kernel values
    bn = max(1, min(n, budget // max(per_sample, 1)))
    if n >= 2:
        bn = min(bn, -(-n // 2))       # keep >= 2 grid steps (v7x dual-TC)
    grid_n = pl.cdiv(n, bn)
    n_pad = grid_n * bn

    # Free row-major reshape: fold H-row *pairs* into the lane axis so even-H
    # rows are the first W lanes of every row.
    x_flat = x.reshape(n, c_in * ho, 2 * w)
    if n_pad != n:
        x_flat = jnp.pad(x_flat, ((0, n_pad - n), (0, 0), (0, 0)))

    kernel = functools.partial(
        _optA_shortcut_kernel, c_in=c_in, pad=pad, ho=ho, wo=wo, w=w)

    bytes_accessed = (n_pad * c_in * ho * 2 * w
                      + n_pad * c_out * ho * wo) * itemsize

    out_flat = pl.pallas_call(
        kernel,
        out_shape=jax.ShapeDtypeStruct((n_pad, c_out * ho, wo), x.dtype),
        grid=(grid_n,),
        in_specs=[pl.BlockSpec((bn, c_in * ho, 2 * w), lambda i: (i, 0, 0))],
        out_specs=pl.BlockSpec((bn, c_out * ho, wo), lambda i: (i, 0, 0)),
        compiler_params=pltpu.CompilerParams(
            dimension_semantics=("parallel",),
            vmem_limit_bytes=48 * 1024 * 1024),
        cost_estimate=pl.CostEstimate(
            flops=0, transcendentals=0, bytes_accessed=bytes_accessed),
    )(x_flat)

    if n_pad != n:
        out_flat = out_flat[:n]
    return out_flat.reshape(n, c_out, ho, wo)


def _reference(x, planes):
    pad = planes // 4
    sub = x[:, :, ::2, ::2]
    return jnp.pad(sub, ((0, 0), (pad, pad), (0, 0), (0, 0)))


if __name__ == "__main__":
    key = jax.random.PRNGKey(0)
    n, c_in, h, w = 2, 4, 16, 16
    planes = 8                       # pad = 2 per side -> C_out = 8
    x = jax.random.normal(key, (n, c_in, h, w), dtype=jnp.float32)

    y = lambda_layer(x, planes)
    y = jax.block_until_ready(y)

    y_ref = _reference(x, planes)
    assert y.shape == y_ref.shape, (y.shape, y_ref.shape)
    assert jnp.allclose(y, y_ref, atol=1e-6, rtol=1e-6), "mismatch vs reference"

    print("KERNEL_OK")
</pallas_src>

<mosaic_0001>
module attributes {stable_mosaic.version = 11 : i64} {
  func.func @_optA_shortcut_kernel(%arg0: i32, %arg1: memref<1x32x32xf32, #tpu.memory_space<vmem>>, %arg2: memref<1x64x8xf32, #tpu.memory_space<vmem>>) attributes {dimension_semantics = [#tpu.dimension_semantics<parallel>], iteration_bounds = array<i64: 2>, scalar_prefetch = 0 : i64, scratch_operands = 0 : i64, tpu.core_type = #tpu.core_type<tc>, window_params = [{transform_indices = @transform_0, window_bounds = array<i64: 1, 32, 32>}, {transform_indices = @transform_1, window_bounds = array<i64: 1, 64, 8>}]} {
    %c0 = arith.constant 0 : index
    %c0_0 = arith.constant 0 : index
    %c0_1 = arith.constant 0 : index
    %0 = vector.load %arg1[%c0, %c0_0, %c0_1] : memref<1x32x32xf32, #tpu.memory_space<vmem>>, vector<1x32x32xf32>
    %1 = vector.extract_strided_slice %0 {offsets = [0, 0, 0], sizes = [1, 32, 16], strides = [1, 1, 1]} : vector<1x32x32xf32> to vector<1x32x16xf32>
    %2 = vector.shape_cast %1 : vector<1x32x16xf32> to vector<32x16xf32>
    %3 = tpu.transpose %2, [1, 0] : vector<32x16xf32> -> vector<16x32xf32>
    %4 = vector.shape_cast %3 : vector<16x32xf32> to vector<8x2x32xf32>
    %5 = vector.extract_strided_slice %4 {offsets = [0, 0, 0], sizes = [8, 1, 32], strides = [1, 1, 1]} : vector<8x2x32xf32> to vector<8x1x32xf32>
    %6 = vector.shape_cast %5 : vector<8x1x32xf32> to vector<8x32xf32>
    %7 = tpu.transpose %6, [1, 0] : vector<8x32xf32> -> vector<32x8xf32>
    %8 = vector.shape_cast %7 : vector<32x8xf32> to vector<1x32x8xf32>
    %cst = arith.constant 0.000000e+00 : f32
    %9 = vector.broadcast %cst : f32 to vector<1x16x8xf32>
    %c0_2 = arith.constant 0 : index
    %c0_3 = arith.constant 0 : index
    %c0_4 = arith.constant 0 : index
    %10 = vector.load %arg2[%c0_2, %c0_3, %c0_4] : memref<1x64x8xf32, #tpu.memory_space<vmem>>, vector<1x16x8xf32>
    tpu.vector_store %arg2[%c0_2, %c0_3, %c0_4], %9 {strides = array<i32>} : memref<1x64x8xf32, #tpu.memory_space<vmem>>, vector<1x16x8xf32>,
    %c0_5 = arith.constant 0 : index
    %c48 = arith.constant 48 : index
    %c0_6 = arith.constant 0 : index
    %11 = vector.load %arg2[%c0_5, %c48, %c0_6] : memref<1x64x8xf32, #tpu.memory_space<vmem>>, vector<1x16x8xf32>
    tpu.vector_store %arg2[%c0_5, %c48, %c0_6], %9 {strides = array<i32>} : memref<1x64x8xf32, #tpu.memory_space<vmem>>, vector<1x16x8xf32>,
    %c0_7 = arith.constant 0 : index
    %c16 = arith.constant 16 : index
    %c0_8 = arith.constant 0 : index
    %12 = vector.load %arg2[%c0_7, %c16, %c0_8] : memref<1x64x8xf32, #tpu.memory_space<vmem>>, vector<1x32x8xf32>
    tpu.vector_store %arg2[%c0_7, %c16, %c0_8], %8 {strides = array<i32>} : memref<1x64x8xf32, #tpu.memory_space<vmem>>, vector<1x32x8xf32>,
    return
  }
  func.func @transform_0(%arg0: i32) -> (i32, i32, i32) {
    %c0_i32 = arith.constant 0 : i32
    %c0_i32_0 = arith.constant 0 : i32
    %c0_i32_1 = arith.constant 0 : i32
    return %arg0, %c0_i32, %c0_i32_0 : i32, i32, i32
  }
  func.func @transform_1(%arg0: i32) -> (i32, i32, i32) {
    %c0_i32 = arith.constant 0 : i32
    %c0_i32_0 = arith.constant 0 : i32
    %c0_i32_1 = arith.constant 0 : i32
    return %arg0, %c0_i32, %c0_i32_0 : i32, i32, i32
  }
}

</mosaic_0001>

<llo_original>
// kernel: tpu_custom_call.1
$region0: #{tpu_custom_call.1}
  #allocation0 [shape = 'u32[]', space=smem, size = 0x4, offset = 0x4, fixed_abs, tag = 'smem constant byte address 0x4 - core index']
  #allocation1 [shape = 'u32[144,128]{1,0:T(1,128)}', space=vmem, size = 0x12000, scoped, tag = 'internal scratch']
  %s0 = inlined_call_operand.hbm [shape: f32[2,32,32], index: 0, kind: input, shape index: {}]
  %s1 = inlined_call_operand.vmem [shape: f32[2,64,8], index: 1, kind: output, shape index: {}]
  %s2 = sld [smem:[#allocation0]]
  $region41: #{tpu_custom_call.1} parent=0
    _
  %s4 = ssub.s32 1, %s2
  %s5 = scalar_select 0, %s4, %s2
  $region1: #{tpu_custom_call.1} parent=0
    #allocation2 [shape = 'u8[32768]{0}', space=vmem, size = 0x8000, scoped, tag = 'input window, operand 0']
    #allocation3 [shape = 's32[2]{0}', space=sflag, size = 0x8, scoped, tag = 'scoped memory for tpu_custom_call.1']
    %6 = vsyncpa [#allocation3], 0
    %s7 = scalar_lea.sflag [#allocation3], 1
    %8 = vsyncpa %s7, 0
    loop: start=0, step=1, limit=4
    $region2: #{tpu_custom_call.1} parent=1 // loop_pre_header
      _
    $region3: #{tpu_custom_call.1} parent=1 // loop_header
      %s10 = sphi 0, %s14
      %p11 = scmp.ge.s32.totalorder %s10, 4
      %s20 = sphi 0, %s22
      %s23 = sphi 0, %s20
      %s24 = sphi 0, %s23
      %s40 = sphi 0, %s24
      %s46 = sphi 0, %s48
      %s49 = sphi 0, %s46
      %s50 = sphi 0, %s49
      %s66 = sphi 0, %s50
    $region4: #{tpu_custom_call.1} parent=1 // loop_header_branch
      %13 = sbr.rel (%p11) target = $region8
    $region5: #{tpu_custom_call.1} parent=1 // loop_body
      %s15 = ssub.s32 %s10, 1
      %s16 = ssub.s32 %s10, 2
      %s17 = sadd.s32 %s10, 1
      %s18 = ssub.s32 %s10, %s17
      %p19 = scmp.eq.s32.totalorder %s18, 0
      %s21 = sadd.s32 %s20, 1
      %s22 = scalar_select %p19, %s20, %s21
      %p25 = pneg %p19
      %p26 = scmp.eq.s32.totalorder %s10, 1
      %p27 = por %p25, %p26
      %p28 = scmp.ne.s32.totalorder %s20, %s23
      %p29 = scmp.eq.s32.totalorder %s10, 0
      %p30 = por %p28, %p29
      %p31 = scmp.ne.s32.totalorder %s20, %s23
      %p32 = scmp.eq.s32.totalorder %s15, 1
      %p33 = por %p31, %p32
      %p34 = scmp.ne.s32.totalorder %s23, %s24
      %p35 = scmp.eq.s32.totalorder %s15, 0
      %p36 = por %p34, %p35
      %p37 = scmp.ne.s32.totalorder %s23, %s24
      %p38 = scmp.eq.s32.totalorder %s16, 1
      %p39 = por %p37, %p38
      %p41 = scmp.ne.s32.totalorder %s24, %s40
      %p42 = scmp.eq.s32.totalorder %s16, 0
      %p43 = por %p41, %p42
      %s44 = ssub.s32 %s10, %s17
      %p45 = scmp.eq.s32.totalorder %s44, 0
      %s47 = sadd.s32 %s46, 1
      %s48 = scalar_select %p45, %s46, %s47
      %p51 = pneg %p45
      %p52 = scmp.eq.s32.totalorder %s10, 1
      %p53 = por %p51, %p52
      %p54 = scmp.ne.s32.totalorder %s46, %s49
      %p55 = scmp.eq.s32.totalorder %s10, 0
      %p56 = por %p54, %p55
      %p57 = scmp.ne.s32.totalorder %s46, %s49
      %p58 = scmp.eq.s32.totalorder %s15, 1
      %p59 = por %p57, %p58
      %p60 = scmp.ne.s32.totalorder %s49, %s50
      %p61 = scmp.eq.s32.totalorder %s15, 0
      %p62 = por %p60, %p61
      %p63 = scmp.ne.s32.totalorder %s49, %s50
      %p64 = scmp.eq.s32.totalorder %s16, 1
      %p65 = por %p63, %p64
      %p67 = scmp.ne.s32.totalorder %s50, %s66
      %p68 = scmp.eq.s32.totalorder %s16, 0
      %p69 = por %p67, %p68
      %p70 = scmp.le.s32.totalorder 1, %s10
      %p71 = scmp.lt.s32.totalorder %s10, 3
      %p72 = pnand %p70, %p71
      %p73 = pneg %p72
      // Predicated region
      $region9: #{tpu_custom_call.1} parent=5 // pred_check
        _
      $region10: #{tpu_custom_call.1} parent=5 // pred_check_branch
        %75 = sbr.rel (%p72) target = $region12
      $region11: #{tpu_custom_call.1} parent=5 // pred_region
        %s76 = ssub.s32 %s10, 1
      $region12: #{tpu_custom_call.1} parent=5 // pred_fallthru
        _
      %p77 = scmp.lt.s32.totalorder %s10, 2
      // Predicated region
      $region13: #{tpu_custom_call.1} parent=5 // pred_check
        %p78 = pneg %p77
      $region14: #{tpu_custom_call.1} parent=5 // pred_check_branch
        %80 = sbr.rel (%p78) target = $region16
      $region15: #{tpu_custom_call.1} parent=5 // pred_region
        // Predicated region
        $region17: #{tpu_custom_call.1} parent=15 // pred_check
          %p81 = pneg %p30
        $region18: #{tpu_custom_call.1} parent=15 // pred_check_branch
          %83 = sbr.rel (%p81) target = $region20
        $region19: #{tpu_custom_call.1} parent=15 // pred_region
          %s84 = sand.u32 %s20, 1
          %s85 = scalar_lea.sflag [#allocation3], %s84
          %s86 = sand.u32 %s20, 1
          %s87 = smul.addr %s86, 32
          %s88 = scalar_lea.vmem [#allocation2], %s87
          %s90 = ssub.s32 512, 512
          %91 = vsyncadd %s85, %s90
          %s92 = smul.addr %s10, 4
          %s93 = smul.addr %s92, 128
          %s94 = scalar_lea.hbm %s0, %s93
          %s95 = sshll.u32 %s88, 4
          %s96 = int_to_ptr.vmem [resolvable:$true] %s95
          %101 = dma.hbm_to_vmem [thread:$0]  %s94, 512, %s96, %s85, 128, 128, 8
        $region20: #{tpu_custom_call.1} parent=15 // pred_fallthru
          _
      $region16: #{tpu_custom_call.1} parent=5 // pred_fallthru
        _
      %p102 = scmp.le.s32.totalorder 1, %s10
      %p103 = scmp.lt.s32.totalorder %s10, 3
      %p104 = pnand %p102, %p103
      %p105 = pneg %p104
      // Predicated region
      $region21: #{tpu_custom_call.1} parent=5 // pred_check
        _
      $region22: #{tpu_custom_call.1} parent=5 // pred_check_branch
        %107 = sbr.rel (%p104) target = $region24
      $region23: #{tpu_custom_call.1} parent=5 // pred_region
        %s108 = ssub.s32 %s10, 1
        %s109 = sand.u32 %s23, 1
        %s110 = scalar_lea.sflag [#allocation3], %s109
        %s111 = sand.u32 %s23, 1
        %s112 = smul.addr %s111, 32
        %s113 = scalar_lea.vmem [#allocation2], %s112
        // Predicated region
        $region25: #{tpu_custom_call.1} parent=23 // pred_check
          %p114 = pneg %p36
        $region26: #{tpu_custom_call.1} parent=23 // pred_check_branch
          %116 = sbr.rel (%p114) target = $region28
        $region27: #{tpu_custom_call.1} parent=23 // pred_region
          %117 = dma.done %s110, 512
        $region28: #{tpu_custom_call.1} parent=23 // pred_fallthru
          _
        %s118 = sand.u32 %s23, 1
        %s119 = scalar_lea.sflag [#allocation3], %s118
        %s120 = sand.u32 %s23, 1
        %s121 = smul.addr %s120, 32
        %s122 = scalar_lea.vmem [#allocation2], %s121
        %p123 = pneg %p36
        %p124 = pneg %p33
        %p125 = pneg %p62
        %p126 = pneg %p59
        %p127 = scmp.lt.s32.totalorder %s15, 1
        %s128 = scalar_select %p127, %s15, 1
        %s129 = smul.addr %s128, 8
        %s130 = smul.addr %s129, 8
        %s131 = scalar_lea.vmem %s1, %s130
        %p132 = scmp.lt.s32.totalorder %s15, 1
        %s133 = scalar_select %p132, %s15, 1
        %s134 = smul.addr %s133, 8
        %s135 = smul.addr %s134, 8
        %s136 = scalar_lea.vmem %s1, %s135
        %v137 = vld [vmem:[%s113] sm:$0xff]
        %v138 = vld [vmem:[%s113 + $0x8] sm:$0xff]
        %v139 = vld [vmem:[%s113 + $0x10] sm:$0xff]
        %v140 = vld [vmem:[%s113 + $0x18] sm:$0xff]
        %141 = vxpose.xlu0.b32.start [1/16] %v137, 128
        %142 = vxpose.xlu0.b32.cont [2/16] %v138, 128
        %143 = vxpose.xlu0.b32.cont [3/16] %v139, 128
        %144 = vxpose.xlu0.b32.cont [4/16] %v140, 128
        %145 = vxpose.xlu0.b32.cont [5/16] 0.0, 128
        %146 = vxpose.xlu0.b32.cont [6/16] 0.0, 128
        %147 = vxpose.xlu0.b32.cont [7/16] 0.0, 128
        %148 = vxpose.xlu0.b32.cont [8/16] 0.0, 128
        %149 = vxpose.xlu0.b32.cont [9/16] 0.0, 128
        %150 = vxpose.xlu0.b32.cont [10/16] 0.0, 128
        %151 = vxpose.xlu0.b32.cont [11/16] 0.0, 128
        %152 = vxpose.xlu0.b32.cont [12/16] 0.0, 128
        %153 = vxpose.xlu0.b32.cont [13/16] 0.0, 128
        %154 = vxpose.xlu0.b32.cont [14/16] 0.0, 128
        %155 = vxpose.xlu0.b32.cont [15/16] 0.0, 128
        %156 = vxpose.xlu0.b32.end [16/16] 0.0, 128
        %v157 = vpop.trf.xlu0
        %v158 = vpop.trf.xlu0
        %v159 = vpop.trf.xlu0
        %v160 = vpop.trf.xlu0
        %v161 = vpop.trf.xlu0
        %v162 = vpop.trf.xlu0
        %v163 = vpop.trf.xlu0
        %v164 = vpop.trf.xlu0
        %v165 = vpop.trf.xlu0
        %v166 = vpop.trf.xlu0
        %v167 = vpop.trf.xlu0
        %v168 = vpop.trf.xlu0
        %v169 = vpop.trf.xlu0
        %v170 = vpop.trf.xlu0
        %v171 = vpop.trf.xlu0
        %v172 = vpop.trf.xlu0
        %v175 = vcombine.high %v157, %v157
        %v177 = vunpack.c.l.s4 1983009808
        %v178 = vunpack.c.0.s8 %v177
        %v179 = vlaneseq
        %v180 = vshrl.u32 %v179, 7
        %v181 = vsub.s32 %v178, %v180
        %v182 = vrot.slane %v157, %v181
        %v184 = vunpack.c.l.s4 1983009808
        %v185 = vunpack.c.0.s8 %v184
        %v186 = vlaneseq
        %v187 = vshrl.u32 %v186, 7
        %v188 = vsub.s32 %v185, %v187
        %v189 = vrot.slane %v175, %v188
        %v190 = vcombine.high %v182, %v182
        %v191 = vcombine.high %v189, %v189
        %v192 = vcombine.high %v158, %v158
        %v194 = vunpack.c.l.s4 1983009808
        %v195 = vunpack.c.0.s8 %v194
        %v196 = vlaneseq
        %v197 = vshrl.u32 %v196, 7
        %v198 = vsub.s32 %v195, %v197
        %v199 = vrot.slane %v158, %v198
        %v201 = vunpack.c.l.s4 1983009808
        %v202 = vunpack.c.0.s8 %v201
        %v203 = vlaneseq
        %v204 = vshrl.u32 %v203, 7
        %v205 = vsub.s32 %v202, %v204
        %v206 = vrot.slane %v192, %v205
        %v207 = vcombine.high %v199, %v199
        %v208 = vcombine.high %v206, %v206
        %v209 = vlaneseq
        %v210 = vshrl.u32 %v209, 7
        %v211 = vsub.s32 0, %v210
        %v212 = vrot.slane %v182, %v211
        %v213 = vlaneseq
        %v214 = vshrl.u32 %v213, 7
        %v215 = vsub.s32 0, %v214
        %v216 = vrot.slane %v190, %v215
        %v217 = vlaneseq
        %v218 = vshrl.u32 %v217, 7
        %v219 = vsub.s32 0, %v218
        %v220 = vrot.slane %v189, %v219
        %v221 = vlaneseq
        %v222 = vshrl.u32 %v221, 7
        %v223 = vsub.s32 0, %v222
        %v224 = vrot.slane %v191, %v223
        %v225 = vlaneseq
        %v226 = vshrl.u32 %v225, 7
        %v227 = vsub.s32 0, %v226
        %v228 = vrot.slane %v199, %v227
        %v229 = vlaneseq
        %v230 = vshrl.u32 %v229, 7
        %v231 = vsub.s32 0, %v230
        %v232 = vrot.slane %v207, %v231
        %v233 = vlaneseq
        %v234 = vshrl.u32 %v233, 7
        %v235 = vsub.s32 0, %v234
        %v236 = vrot.slane %v206, %v235
        %v237 = vlaneseq
        %v238 = vshrl.u32 %v237, 7
        %v239 = vsub.s32 0, %v238
        %v240 = vrot.slane %v208, %v239
        %vm241 = vcmask 1041409
        %v242 = vsel %vm241, %v216, %v212
        %vm243 = vcmask 1042434
        %v244 = vsel %vm243, %v220, %v242
        %vm245 = vcmask 1043459
        %v246 = vsel %vm245, %v224, %v244
        %vm247 = vcmask 1044484
        %v248 = vsel %vm247, %v228, %v246
        %vm249 = vcmask 1045509
        %v250 = vsel %vm249, %v232, %v248
        %vm251 = vcmask 1046534
        %v252 = vsel %vm251, %v236, %v250
        %vm253 = vcmask 1047559
        %v254 = vsel %vm253, %v240, %v252
        %256 = vxpose.xlu0.b32.start [1/16] %v254, 128
        %257 = vxpose.xlu0.b32.cont [2/16] 0.0, 128
        %258 = vxpose.xlu0.b32.cont [3/16] 0.0, 128
        %259 = vxpose.xlu0.b32.cont [4/16] 0.0, 128
        %260 = vxpose.xlu0.b32.cont [5/16] 0.0, 128
        %261 = vxpose.xlu0.b32.cont [6/16] 0.0, 128
        %262 = vxpose.xlu0.b32.cont [7/16] 0.0, 128
        %263 = vxpose.xlu0.b32.cont [8/16] 0.0, 128
        %264 = vxpose.xlu0.b32.cont [9/16] 0.0, 128
        %265 = vxpose.xlu0.b32.cont [10/16] 0.0, 128
        %266 = vxpose.xlu0.b32.cont [11/16] 0.0, 128
        %267 = vxpose.xlu0.b32.cont [12/16] 0.0, 128
        %268 = vxpose.xlu0.b32.cont [13/16] 0.0, 128
        %269 = vxpose.xlu0.b32.cont [14/16] 0.0, 128
        %270 = vxpose.xlu0.b32.cont [15/16] 0.0, 128
        %271 = vxpose.xlu0.b32.end [16/16] 0.0, 128
        %v272 = vpop.trf.xlu0
        %v273 = vpop.trf.xlu0
        %v274 = vpop.trf.xlu0
        %v275 = vpop.trf.xlu0
        %v276 = vpop.trf.xlu0
        %v277 = vpop.trf.xlu0
        %v278 = vpop.trf.xlu0
        %v279 = vpop.trf.xlu0
        %v280 = vpop.trf.xlu0
        %v281 = vpop.trf.xlu0
        %v282 = vpop.trf.xlu0
        %v283 = vpop.trf.xlu0
        %v284 = vpop.trf.xlu0
        %v285 = vpop.trf.xlu0
        %v286 = vpop.trf.xlu0
        %v287 = vpop.trf.xlu0
        %vm288 = vcmask 64512
        %289 = vst.msk [vmem:[%s136] sm:$0xff] %vm288, 0.0
        %290 = vst.msk [vmem:[%s136 + $0x8] sm:$0xff] %vm288, 0.0
        %291 = vst.msk [vmem:[%s136 + $0x30] sm:$0xff] %vm288, 0.0
        %292 = vst.msk [vmem:[%s136 + $0x38] sm:$0xff] %vm288, 0.0
        %293 = vst.msk [vmem:[%s136 + $0x10] sm:$0xff] %vm288, %v272
        %294 = vst.msk [vmem:[%s136 + $0x18] sm:$0xff] %vm288, %v273
        %295 = vst.msk [vmem:[%s136 + $0x20] sm:$0xff] %vm288, %v274
        %296 = vst.msk [vmem:[%s136 + $0x28] sm:$0xff] %vm288, %v275
        %p297 = scmp.lt.s32.totalorder %s15, 1
        %s298 = scalar_select %p297, %s15, 1
        %s299 = smul.addr %s298, 8
        %s300 = smul.addr %s299, 8
        %s301 = scalar_lea.vmem %s1, %s300
        // Predicated region
        $region29: #{tpu_custom_call.1} parent=23 // pred_check
          %p302 = pneg %p59
        $region30: #{tpu_custom_call.1} parent=23 // pred_check_branch
          %304 = sbr.rel (%p302) target = $region32
        $region31: #{tpu_custom_call.1} parent=23 // pred_region
          _
        $region32: #{tpu_custom_call.1} parent=23 // pred_fallthru
          _
      $region24: #{tpu_custom_call.1} parent=5 // pred_fallthru
        _
      %p305 = scmp.le.s32.totalorder 2, %s10
      // Predicated region
      $region33: #{tpu_custom_call.1} parent=5 // pred_check
        %p306 = pneg %p305
      $region34: #{tpu_custom_call.1} parent=5 // pred_check_branch
        %308 = sbr.rel (%p306) target = $region36
      $region35: #{tpu_custom_call.1} parent=5 // pred_region
        %s309 = ssub.s32 %s10, 2
        // Predicated region
        $region37: #{tpu_custom_call.1} parent=35 // pred_check
          %p310 = pneg %p65
        $region38: #{tpu_custom_call.1} parent=35 // pred_check_branch
          %312 = sbr.rel (%p310) target = $region40
        $region39: #{tpu_custom_call.1} parent=35 // pred_region
          %p313 = scmp.lt.s32.totalorder %s16, 1
          %s314 = scalar_select %p313, %s16, 1
          %s315 = smul.addr %s314, 8
          %s316 = smul.addr %s315, 8
          %s317 = scalar_lea.vmem %s1, %s316
        $region40: #{tpu_custom_call.1} parent=35 // pred_fallthru
          _
      $region36: #{tpu_custom_call.1} parent=5 // pred_fallthru
        _
    $region6: #{tpu_custom_call.1} parent=1 // loop_footer
      %s14 = sadd.s32 1, %s10
    $region7: #{tpu_custom_call.1} parent=1 // loop_footer_branch
      %9 = sbr.rel target = $region3
    $region8: #{tpu_custom_call.1} parent=1 // loop_exit
      _
    %318 = vsyncpa [#allocation3], 1
    %s319 = scalar_lea.sflag [#allocation3], 1
    %320 = vsyncpa %s319, 1

</llo_original>
